<compile_context>
chip_gen: v5e
topology: v5e:2x2
jax: 0.10.0
libtpu: 0.0.40
codegen_flags: <defaults>
</compile_context>

<pallas_src>
import functools

import jax
import jax.numpy as jnp
from jax import lax
from jax.experimental import pallas as pl
from jax.experimental.pallas import tpu as pltpu


def _cdiv(a, b):
    return -(-a // b)


def _round_up(x, m):
    return _cdiv(x, m) * m


def _best_divisor(k, start, floor):
    """Largest tile <= start, >= floor (halving), that divides k exactly."""
    t = start
    while t >= floor:
        if k % t == 0:
            return t
        t //= 2
    return 0


def _vmem_caps():
    """(tile budget, mosaic limit) derived from this generation's VMEM."""
    try:
        cap = int(pltpu.get_tpu_info().vmem_capacity_bytes)
    except Exception:
        cap = 64 * 1024 * 1024  # conservative: v7x has 64 MiB per TensorCore
    budget = (cap * 25) // 32   # ~78% for tile selection
    limit = (cap * 7) // 8      # ~87% handed to Mosaic (headroom for scratch)
    return budget, limit


# ---------------------------------------------------------------------------
# Kernels
# ---------------------------------------------------------------------------

def _fullk_kernel(x_ref, w_ref, o_ref, *, compute_dtype):
    # x_ref: (tm, K), w_ref: (tn, K) in native [vocab, hidden] layout.
    # Contract over the shared K axis (A @ B.T form, native on the MXU).
    o_ref[...] = lax.dot_general(
        x_ref[...].astype(compute_dtype),
        w_ref[...].astype(compute_dtype),
        dimension_numbers=(((1,), (1,)), ((), ())),
        preferred_element_type=jnp.float32,
    ).astype(o_ref.dtype)


def _ktiled_kernel(x_ref, w_ref, o_ref, acc_ref, *, compute_dtype):
    # Same contraction; K is the innermost (reduction) grid axis.
    @pl.when(pl.program_id(2) == 0)
    def _():
        acc_ref[...] = jnp.zeros_like(acc_ref)

    acc_ref[...] += lax.dot_general(
        x_ref[...].astype(compute_dtype),
        w_ref[...].astype(compute_dtype),
        dimension_numbers=(((1,), (1,)), ((), ())),
        preferred_element_type=jnp.float32,
    )

    @pl.when(pl.program_id(2) == pl.num_programs(2) - 1)
    def _():
        o_ref[...] = acc_ref[...].astype(o_ref.dtype)


# ---------------------------------------------------------------------------
# Wrapper
# ---------------------------------------------------------------------------

def tied_embeddings_transposed(
    x,
    weight,
    *,
    compute_dtype=None,        # None -> x.dtype (PyTorch f32 semantics); pass bf16 for speed
    out_dtype=None,            # None -> x.dtype; pass bf16 to halve logits writeback
    tm_max=512,
    tn_max=1024,
    tk_max=512,
    full_k_max_bytes=16 * 1024,    # full-K when K * compute_itemsize fits this
    vmem_budget_bytes=None,
    vmem_limit_bytes=None,
):
    """output = x @ weight.T  (weight: [vocab, hidden], as nn.Embedding)."""
    *lead, K = x.shape
    V, K_w = weight.shape
    assert K == K_w, "hidden dim mismatch"

    compute_dtype = jnp.dtype(x.dtype if compute_dtype is None else compute_dtype)
    out_dtype = jnp.dtype(x.dtype if out_dtype is None else out_dtype)

    x_bytes = jnp.dtype(x.dtype).itemsize
    w_bytes = jnp.dtype(weight.dtype).itemsize
    in_bytes = compute_dtype.itemsize
    out_bytes = out_dtype.itemsize

    x_flat = x.reshape(-1, K)
    M = x_flat.shape[0]

    auto_budget, auto_limit = _vmem_caps()
    budget = auto_budget if vmem_budget_bytes is None else vmem_budget_bytes
    limit = auto_limit if vmem_limit_bytes is None else vmem_limit_bytes

    # ---- tile selection -----------------------------------------------------
    lane = 128
    sub = max(8 * (4 // b) for b in (x_bytes, w_bytes, in_bytes))  # sublane pack

    m_ceil = _round_up(M, sub)
    v_ceil = _round_up(V, lane)

    tm = m_ceil if m_ceil <= tm_max else tm_max
    tn = min(tn_max, v_ceil)
    tn_floor = min(256, v_ceil)          # keep the 256-wide MXU fed (v6e / v7x)

    def vmem_bytes(tm_, tn_, tk_, ktiled):
        b = 2 * tm_ * tk_ * x_bytes      # double-buffered x tile (native dtype)
        b += 2 * tn_ * tk_ * w_bytes     # double-buffered weight tile (native dtype)
        b += 2 * tm_ * tn_ * out_bytes   # double-buffered output tile
        if ktiled:
            b += tm_ * tn_ * 4           # f32 accumulator scratch
        return b

    def shrink(tm_, tn_, tk_, ktiled):
        while vmem_bytes(tm_, tn_, tk_, ktiled) > budget and tn_ > tn_floor:
            tn_ = max(tn_floor, _round_up(tn_ // 2, lane))
        while vmem_bytes(tm_, tn_, tk_, ktiled) > budget and tm_ > sub:
            tm_ = max(sub, _round_up(tm_ // 2, sub))
        return tm_, tn_

    full_k = K * in_bytes <= full_k_max_bytes
    tk = K
    if not full_k:
        tk = _best_divisor(K, tk_max, lane)
        if tk == 0:                       # no clean divisor: keep K whole
            full_k, tk = True, K

    if full_k:
        tm_f, tn_f = shrink(tm, tn, K, False)
        # Prefer the K-tiled accumulator path over squeezing the vocab tile.
        if tn_f < min(512, tn) and K > tk_max:
            tk_alt = _best_divisor(K, tk_max, lane)
            if tk_alt and tk_alt < K:
                tm_a, tn_a = shrink(tm, tn, tk_alt, True)
                if tn_a > tn_f:
                    full_k, tk, tm, tn = False, tk_alt, tm_a, tn_a
                else:
                    tm, tn = tm_f, tn_f
            else:
                tm, tn = tm_f, tn_f
        else:
            tm, tn = tm_f, tn_f
    else:
        tm, tn = shrink(tm, tn, tk, True)

    m_blocks = _cdiv(M, tm)
    v_blocks = _cdiv(V, tn)
    k_blocks = 1 if full_k else K // tk

    # ---- cost estimate: actual streamed bytes for the chosen grid order -----
    x_reads = 1 if (full_k and m_blocks == 1) else v_blocks
    w_reads = 1 if full_k else m_blocks
    cost = pl.CostEstimate(
        flops=2 * M * V * K,
        transcendentals=0,
        bytes_accessed=(x_reads * M * K * x_bytes
                        + w_reads * V * K * w_bytes
                        + M * V * out_bytes),
    )

    kernel_fullk = functools.partial(_fullk_kernel, compute_dtype=compute_dtype)
    kernel_ktiled = functools.partial(_ktiled_kernel, compute_dtype=compute_dtype)

    if full_k and m_blocks == 1:
        # Whole x resident in VMEM; the vocab table is streamed exactly once.
        grid = (v_blocks,)
        grid_spec = pltpu.PrefetchScalarGridSpec(
            num_scalar_prefetch=0,
            grid=grid,
            in_specs=[
                pl.BlockSpec((tm, K), lambda j: (0, 0)),
                pl.BlockSpec((tn, K), lambda j: (j, 0)),
            ],
            out_specs=pl.BlockSpec((tm, tn), lambda j: (0, j)),
        )
        kernel = kernel_fullk
        dims = ("parallel",)          # vocab axis splits across v7x's two TCs
    elif full_k:
        # Vocab axis outermost: the weight tile stays resident across the
        # inner M loop, so the table is read once; only x tiles re-stream.
        grid = (v_blocks, m_blocks)
        grid_spec = pltpu.PrefetchScalarGridSpec(
            num_scalar_prefetch=0,
            grid=grid,
            in_specs=[
                pl.BlockSpec((tm, K), lambda j, i: (i, 0)),
                pl.BlockSpec((tn, K), lambda j, i: (j, 0)),
            ],
            out_specs=pl.BlockSpec((tm, tn), lambda j, i: (i, j)),
        )
        kernel = kernel_fullk
        dims = ("parallel", "parallel")
    else:
        # K-tiled accumulator path (huge hidden): K innermost, vocab outermost.
        grid = (v_blocks, m_blocks, k_blocks)
        grid_spec = pltpu.PrefetchScalarGridSpec(
            num_scalar_prefetch=0,
            grid=grid,
            in_specs=[
                pl.BlockSpec((tm, tk), lambda j, i, k: (i, k)),
                pl.BlockSpec((tn, tk), lambda j, i, k: (j, k)),
            ],
            out_specs=pl.BlockSpec((tm, tn), lambda j, i, k: (i, j)),
            scratch_shapes=[pltpu.VMEM((tm, tn), jnp.float32)],
        )
        kernel = kernel_ktiled
        dims = ("parallel", "parallel", "arbitrary")

    out_flat = pl.pallas_call(
        kernel,
        out_shape=jax.ShapeDtypeStruct((M, V), out_dtype),
        grid_spec=grid_spec,
        compiler_params=pltpu.CompilerParams(
            dimension_semantics=dims,
            vmem_limit_bytes=limit,
        ),
        cost_estimate=cost,
    )(x_flat, weight)

    return out_flat.reshape(*lead, V)


if __name__ == "__main__":
    key = jax.random.PRNGKey(0)
    k_x, k_w, k_x2, k_w2 = jax.random.split(key, 4)

    batch, seq, hidden, vocab = 2, 8, 32, 128

    # Tied embedding weight [vocab, hidden] (as nn.Embedding.weight).
    weight = jax.random.normal(k_w, (vocab, hidden), dtype=jnp.float32)
    # Input activations [batch, seq, hidden].
    x = jax.random.normal(k_x, (batch, seq, hidden), dtype=jnp.float32)

    # Default path: compute dtype follows x (f32) -> PyTorch matmul semantics.
    out = tied_embeddings_transposed(x, weight)
    out = jax.block_until_ready(out)
    assert out.shape == (batch, seq, vocab)
    assert out.dtype == x.dtype
    ref_f32 = jnp.matmul(x, weight.T)
    assert jnp.allclose(out, ref_f32, atol=1e-4, rtol=1e-4)

    # Explicit bf16-compute fast path (f32 MXU accumulation).
    out_bf16 = tied_embeddings_transposed(x, weight, compute_dtype=jnp.bfloat16)
    out_bf16 = jax.block_until_ready(out_bf16)
    ref_bf16 = (
        lax.dot_general(
            x.astype(jnp.bfloat16).reshape(-1, hidden),
            weight.astype(jnp.bfloat16),
            dimension_numbers=(((1,), (1,)), ((), ())),
            preferred_element_type=jnp.float32,
        )
        .astype(x.dtype)
        .reshape(batch, seq, vocab)
    )
    assert jnp.allclose(out_bf16, ref_bf16, atol=1e-3, rtol=1e-3)
    assert jnp.allclose(out_bf16, ref_f32, atol=1e-1, rtol=2e-2)

    # Exercise the K-tiled accumulator path at a tiny shape (forced).
    hidden2 = 256
    w2 = jax.random.normal(k_w2, (vocab, hidden2), dtype=jnp.float32)
    x2 = jax.random.normal(k_x2, (batch, seq, hidden2), dtype=jnp.float32)
    out2 = tied_embeddings_transposed(x2, w2, full_k_max_bytes=0, tk_max=128)
    out2 = jax.block_until_ready(out2)
    assert out2.shape == (batch, seq, vocab)
    ref2 = jnp.matmul(x2, w2.T)
    assert jnp.allclose(out2, ref2, atol=1e-2, rtol=1e-2)

    print("KERNEL_OK")
</pallas_src>

<mosaic_0001>
module attributes {stable_mosaic.version = 11 : i64} {
  func.func @_fullk_kernel(%arg0: i32, %arg1: memref<16x32xf32, #tpu.memory_space<vmem>>, %arg2: memref<128x32xf32, #tpu.memory_space<vmem>>, %arg3: memref<16x128xf32, #tpu.memory_space<vmem>>) attributes {dimension_semantics = [#tpu.dimension_semantics<parallel>], iteration_bounds = array<i64: 1>, scalar_prefetch = 0 : i64, scratch_operands = 0 : i64, tpu.core_type = #tpu.core_type<tc>, window_params = [{pipeline_mode = #tpu.pipeline_mode<synchronous>, transform_indices = @transform_0, window_bounds = array<i64: 16, 32>}, {transform_indices = @transform_1, window_bounds = array<i64: 128, 32>}, {transform_indices = @transform_2, window_bounds = array<i64: 16, 128>}]} {
    %c0 = arith.constant 0 : index
    %c0_0 = arith.constant 0 : index
    %0 = vector.load %arg1[%c0, %c0_0] : memref<16x32xf32, #tpu.memory_space<vmem>>, vector<16x32xf32>
    %c0_1 = arith.constant 0 : index
    %c0_2 = arith.constant 0 : index
    %1 = vector.load %arg2[%c0_1, %c0_2] : memref<128x32xf32, #tpu.memory_space<vmem>>, vector<128x32xf32>
    %cst = arith.constant dense<0.000000e+00> : vector<16x128xf32>
    %2 = tpu.matmul %0, %1, %cst {dimension_numbers = #tpu.dot_dimension_numbers<[1], [1], [0], [0], [0, 0, 1, 0], [], []>} : vector<16x32xf32>, vector<128x32xf32>, vector<16x128xf32> -> vector<16x128xf32>
    %c0_3 = arith.constant 0 : index
    %c0_4 = arith.constant 0 : index
    %3 = vector.load %arg3[%c0_3, %c0_4] : memref<16x128xf32, #tpu.memory_space<vmem>>, vector<16x128xf32>
    tpu.vector_store %arg3[%c0_3, %c0_4], %2 {strides = array<i32>} : memref<16x128xf32, #tpu.memory_space<vmem>>, vector<16x128xf32>,
    return
  }
  func.func @transform_0(%arg0: i32) -> (i32, i32) {
    %c0_i32 = arith.constant 0 : i32
    %c0_i32_0 = arith.constant 0 : i32
    %c0_i32_1 = arith.constant 0 : i32
    return %c0_i32, %c0_i32_0 : i32, i32
  }
  func.func @transform_1(%arg0: i32) -> (i32, i32) {
    %c0_i32 = arith.constant 0 : i32
    %c0_i32_0 = arith.constant 0 : i32
    return %arg0, %c0_i32 : i32, i32
  }
  func.func @transform_2(%arg0: i32) -> (i32, i32) {
    %c0_i32 = arith.constant 0 : i32
    %c0_i32_0 = arith.constant 0 : i32
    return %c0_i32, %arg0 : i32, i32
  }
}

</mosaic_0001>

<llo_original>
// kernel: tpu_custom_call.1
$region0: #{tpu_custom_call.1}
  #allocation0 [shape = 'u32[]', space=smem, size = 0x4, offset = 0x4, fixed_abs, tag = 'smem constant byte address 0x4 - core index']
  #allocation1 [shape = 'u32[72,128]{1,0:T(1,128)}', space=vmem, size = 0x9000, scoped, tag = 'internal scratch']
  %s0 = inlined_call_operand.vmem [shape: f32[16,32], index: 0, kind: input, shape index: {}]
  %s1 = inlined_call_operand.vmem [shape: f32[128,32], index: 1, kind: input, shape index: {}]
  %s2 = inlined_call_operand.hbm [shape: f32[16,128], index: 2, kind: output, shape index: {}]
  %s3 = sld [smem:[#allocation0]]
  $region18: #{tpu_custom_call.1} parent=0
    _
  %s5 = ssub.s32 1, %s3
  %s6 = scalar_select 0, %s5, %s3
  $region1: #{tpu_custom_call.1} parent=0
    #allocation2 [shape = 'u8[8192]{0}', space=vmem, size = 0x2000, scoped, tag = 'output window, operand 0, single buffered']
    #allocation3 [shape = 's32[1]{0}', space=sflag, size = 0x4, scoped, tag = 'scoped memory for tpu_custom_call.1']
    %7 = vsyncpa [#allocation3], 0
    // Predicated region
    $region2: #{tpu_custom_call.1} parent=1 // pred_check
      _
    $region3: #{tpu_custom_call.1} parent=1 // pred_check_branch
      %9 = sbr.rel (0) target = $region5
    $region4: #{tpu_custom_call.1} parent=1 // pred_region
      _
    $region5: #{tpu_custom_call.1} parent=1 // pred_fallthru
      _
    // Predicated region
    $region6: #{tpu_custom_call.1} parent=1 // pred_check
      _
    $region7: #{tpu_custom_call.1} parent=1 // pred_check_branch
      %11 = sbr.rel (0) target = $region9
    $region8: #{tpu_custom_call.1} parent=1 // pred_region
      _
    $region9: #{tpu_custom_call.1} parent=1 // pred_fallthru
      _
    %v12 = vld [vmem:[%s0] sm:$0xff]
    %v13 = vld [vmem:[%s0 + $0x8] sm:$0xff]
    %v14 = vld [vmem:[%s1] sm:$0xff]
    %v15 = vld [vmem:[%s1 + $0x8] sm:$0xff]
    %v16 = vld [vmem:[%s1 + $0x10] sm:$0xff]
    %v17 = vld [vmem:[%s1 + $0x18] sm:$0xff]
    %v18 = vld [vmem:[%s1 + $0x20] sm:$0xff]
    %v19 = vld [vmem:[%s1 + $0x28] sm:$0xff]
    %v20 = vld [vmem:[%s1 + $0x30] sm:$0xff]
    %v21 = vld [vmem:[%s1 + $0x38] sm:$0xff]
    %v22 = vld [vmem:[%s1 + $0x40] sm:$0xff]
    %v23 = vld [vmem:[%s1 + $0x48] sm:$0xff]
    %v24 = vld [vmem:[%s1 + $0x50] sm:$0xff]
    %v25 = vld [vmem:[%s1 + $0x58] sm:$0xff]
    %v26 = vld [vmem:[%s1 + $0x60] sm:$0xff]
    %v27 = vld [vmem:[%s1 + $0x68] sm:$0xff]
    %v28 = vld [vmem:[%s1 + $0x70] sm:$0xff]
    %v29 = vld [vmem:[%s1 + $0x78] sm:$0xff]
    %vm30 = vcmask 261120
    %v32 = vsel %vm30, %v12, 0
    %v35 = vsel %vm30, %v13, 0
    %v38 = vsel %vm30, %v14, 0
    %v41 = vsel %vm30, %v15, 0
    %v44 = vsel %vm30, %v16, 0
    %v47 = vsel %vm30, %v17, 0
    %v50 = vsel %vm30, %v18, 0
    %v53 = vsel %vm30, %v19, 0
    %v56 = vsel %vm30, %v20, 0
    %v59 = vsel %vm30, %v21, 0
    %v62 = vsel %vm30, %v22, 0
    %v65 = vsel %vm30, %v23, 0
    %v68 = vsel %vm30, %v24, 0
    %v71 = vsel %vm30, %v25, 0
    %v74 = vsel %vm30, %v26, 0
    %v77 = vsel %vm30, %v27, 0
    %v80 = vsel %vm30, %v28, 0
    %v83 = vsel %vm30, %v29, 0
    %85 = vmatpush.xpose.msra.mxu0 %v83
    %86 = vmatpush.xpose.msra.mxu0 %v80
    %87 = vmatpush.xpose.msra.mxu0 %v77
    %88 = vmatpush.xpose.msra.mxu0 %v74
    %89 = vmatpush.xpose.msra.mxu0 %v71
    %90 = vmatpush.xpose.msra.mxu0 %v68
    %91 = vmatpush.xpose.msra.mxu0 %v65
    %92 = vmatpush.xpose.msra.mxu0 %v62
    %93 = vmatpush.xpose.msra.mxu0 %v59
    %94 = vmatpush.xpose.msra.mxu0 %v56
    %95 = vmatpush.xpose.msra.mxu0 %v53
    %96 = vmatpush.xpose.msra.mxu0 %v50
    %97 = vmatpush.xpose.msra.mxu0 %v47
    %98 = vmatpush.xpose.msra.mxu0 %v44
    %99 = vmatpush.xpose.msra.mxu0 %v41
    %100 = vmatpush.xpose.msra.mxu0 %v38
    %101 = vmatmul.f32.gmra.mxu0 %v32
    %v102 = vpop.f32.mrf.mxu0
    %v103 = vadd.f32 0.0, %v102
    %104 = vmatmul.f32.gmra.mxu0 %v35
    %v105 = vpop.f32.mrf.mxu0
    %v106 = vadd.f32 0.0, %v105
    %107 = vdwg.mxu0
    %108 = vst [vmem:[#allocation2] sm:$0xff] %v103
    %109 = vst [vmem:[#allocation2 + $0x8] sm:$0xff] %v106
    // Predicated region
    $region10: #{tpu_custom_call.1} parent=1 // pred_check
      _
    $region11: #{tpu_custom_call.1} parent=1 // pred_check_branch
      %111 = sbr.rel (0) target = $region13
    $region12: #{tpu_custom_call.1} parent=1 // pred_region
      %113 = vsyncadd [#allocation3], 0
      %s114 = sshll.u32 [#allocation2], 4
      %s115 = int_to_ptr.vmem [resolvable:$true] %s114
      %s116 = sshll.u32 %s2, 4
      %s117 = int_to_ptr.hbm [resolvable:$true] %s116
      %122 = dma.vmem_to_hbm [thread:$0]  %s115, 256, %s117, [#allocation3], 128, 128, 8
    $region13: #{tpu_custom_call.1} parent=1 // pred_fallthru
      _
    // Predicated region
    $region14: #{tpu_custom_call.1} parent=1 // pred_check
      _
    $region15: #{tpu_custom_call.1} parent=1 // pred_check_branch
      %124 = sbr.rel (0) target = $region17
    $region16: #{tpu_custom_call.1} parent=1 // pred_region
      %126 = dma.done [#allocation3], 256
    $region17: #{tpu_custom_call.1} parent=1 // pred_fallthru
      _
    %127 = vsyncpa [#allocation3], 1

</llo_original>
